<compile_context>
chip_gen: v7x
topology: tpu7x:2x2x1
jax: 0.10.0
libtpu: 0.0.40
codegen_flags: <defaults>
</compile_context>

<pallas_src>
import math

import jax
import jax.numpy as jnp
from jax.experimental import pallas as pl
from jax.experimental.pallas import tpu as pltpu


# ------------------------- Pallas kernel: x + pe ---------------------------
def _pe_add_kernel(x_ref, pe_ref, o_ref):
    # x_ref : (tm, N) tile of the flattened input rows
    # pe_ref: (1, N) positional-encoding row, broadcast over the tm rows
    o_ref[...] = x_ref[...] + pe_ref[...]


def _row_broadcast_add(x2d, pe_row):
    """out[m, n] = x2d[m, n] + pe_row[n]  (single Pallas call, no padding copies)."""
    M, N = x2d.shape
    # Full-dim blocks by default; tile the row axis only when it is large and 8-aligned.
    tm = M
    if M > 1024:
        for cand in (512, 256, 128, 64, 32, 16, 8):
            if M % cand == 0:
                tm = cand
                break
    grid_m = M // tm
    return pl.pallas_call(
        _pe_add_kernel,
        out_shape=jax.ShapeDtypeStruct((M, N), x2d.dtype),
        grid_spec=pltpu.PrefetchScalarGridSpec(
            num_scalar_prefetch=0,
            grid=(grid_m,),
            in_specs=[
                pl.BlockSpec((tm, N), lambda i: (i, 0)),
                pl.BlockSpec((1, N), lambda i: (0, 0)),
            ],
            out_specs=pl.BlockSpec((tm, N), lambda i: (i, 0)),
        ),
        compiler_params=pltpu.CompilerParams(
            dimension_semantics=("parallel",)),
    )(x2d, pe_row.reshape(1, N))


# --------------------------- PositionalEncoding -----------------------------
def make_positional_encoding(d_model, max_len, dtype=jnp.float32):
    """Builds the `pe` buffer exactly like the module __init__: shape (1, max_len, d_model).
    Note: the sin/cos interleave assumes an even d_model (same as the PyTorch code)."""
    position = jnp.arange(0, max_len, dtype=jnp.float32)[:, None]
    div_term = jnp.exp(jnp.arange(0, d_model, 2, dtype=jnp.float32)
                       * (-math.log(10000.0) / d_model))
    pe = jnp.zeros((max_len, d_model), jnp.float32)
    pe = pe.at[:, 0::2].set(jnp.sin(position * div_term))
    pe = pe.at[:, 1::2].set(jnp.cos(position * div_term))
    return pe[None].astype(dtype)                       # (1, max_len, d_model)


def positional_encoding_forward(x, pe, dropout_p=0.0, training=False):
    """Mirrors PositionalEncoding.forward (eval mode)."""
    # TODO(synk): training-mode dropout (applied to the PE slice) is not implemented.
    del dropout_p, training
    d_model = pe.shape[-1]
    if x.ndim <= 2:
        # x: (S, D); pe[:, :S, :] -> (1, S, D); broadcast result shape (1, S, D)
        S = x.shape[0]
        pe_slice = pe[0, :S, :]                                        # (S, D)
        out = _row_broadcast_add(x.reshape(1, S * d_model),
                                 pe_slice.reshape(S * d_model))
        return out.reshape(1, S, d_model)
    # x: (S, B, D); pe[:, :x.shape[1], :] -> (1, B, D), broadcast over leading S
    S, B, D = x.shape
    assert D == d_model
    pe_slice = pe[0, :B, :]                                            # (B, D)
    out = _row_broadcast_add(x.reshape(S, B * D), pe_slice.reshape(B * D))
    return out.reshape(S, B, D)


# ----------------------------------- main -----------------------------------
if __name__ == "__main__":
    SEQ_LEN, BATCH, D_MODEL, MAX_LEN = 8, 4, 32, 16

    key = jax.random.PRNGKey(0)
    k3d, k2d = jax.random.split(key)

    pe = make_positional_encoding(D_MODEL, MAX_LEN)

    fwd = jax.jit(positional_encoding_forward)

    # --- 3-D input path:  x[seq_len, batch, d_model],  dim = 1 -------------
    x3 = jax.random.normal(k3d, (SEQ_LEN, BATCH, D_MODEL), jnp.float32)
    out3 = jax.block_until_ready(fwd(x3, pe))
    ref3 = x3 + pe[:, :x3.shape[1], :]
    assert out3.shape == ref3.shape, (out3.shape, ref3.shape)
    assert jnp.allclose(out3, ref3, atol=1e-6, rtol=1e-6)

    # --- 2-D input path:  x[seq_len, d_model],  dim = 0 ---------------------
    x2 = jax.random.normal(k2d, (SEQ_LEN, D_MODEL), jnp.float32)
    out2 = jax.block_until_ready(fwd(x2, pe))
    ref2 = x2 + pe[:, :x2.shape[0], :]
    assert out2.shape == ref2.shape, (out2.shape, ref2.shape)
    assert jnp.allclose(out2, ref2, atol=1e-6, rtol=1e-6)

    assert bool(jnp.all(jnp.isfinite(out3))) and bool(jnp.all(jnp.isfinite(out2)))
    print("KERNEL_OK")
</pallas_src>

<mosaic_0001>
module attributes {stable_mosaic.version = 11 : i64} {
  func.func @_pe_add_kernel(%arg0: i32, %arg1: memref<8x128xf32, #tpu.memory_space<vmem>>, %arg2: memref<1x128xf32, #tpu.memory_space<vmem>>, %arg3: memref<8x128xf32, #tpu.memory_space<vmem>>) attributes {dimension_semantics = [#tpu.dimension_semantics<parallel>], iteration_bounds = array<i64: 1>, scalar_prefetch = 0 : i64, scratch_operands = 0 : i64, tpu.core_type = #tpu.core_type<tc>, window_params = [{transform_indices = @transform_0, window_bounds = array<i64: 8, 128>}, {pipeline_mode = #tpu.pipeline_mode<synchronous>, transform_indices = @transform_1, window_bounds = array<i64: 1, 128>}, {transform_indices = @transform_2, window_bounds = array<i64: 8, 128>}]} {
    %c0 = arith.constant 0 : index
    %c0_0 = arith.constant 0 : index
    %0 = vector.load %arg1[%c0, %c0_0] : memref<8x128xf32, #tpu.memory_space<vmem>>, vector<8x128xf32>
    %c0_1 = arith.constant 0 : index
    %c0_2 = arith.constant 0 : index
    %1 = vector.load %arg2[%c0_1, %c0_2] : memref<1x128xf32, #tpu.memory_space<vmem>>, vector<1x128xf32>
    %2 = vector.broadcast %1 : vector<1x128xf32> to vector<8x128xf32>
    %3 = arith.addf %0, %2 : vector<8x128xf32>
    %c0_3 = arith.constant 0 : index
    %c0_4 = arith.constant 0 : index
    %4 = vector.load %arg3[%c0_3, %c0_4] : memref<8x128xf32, #tpu.memory_space<vmem>>, vector<8x128xf32>
    tpu.vector_store %arg3[%c0_3, %c0_4], %3 {strides = array<i32>} : memref<8x128xf32, #tpu.memory_space<vmem>>, vector<8x128xf32>,
    return
  }
  func.func @transform_0(%arg0: i32) -> (i32, i32) {
    %c0_i32 = arith.constant 0 : i32
    %c0_i32_0 = arith.constant 0 : i32
    return %arg0, %c0_i32 : i32, i32
  }
  func.func @transform_1(%arg0: i32) -> (i32, i32) {
    %c0_i32 = arith.constant 0 : i32
    %c0_i32_0 = arith.constant 0 : i32
    %c0_i32_1 = arith.constant 0 : i32
    return %c0_i32, %c0_i32_0 : i32, i32
  }
  func.func @transform_2(%arg0: i32) -> (i32, i32) {
    %c0_i32 = arith.constant 0 : i32
    %c0_i32_0 = arith.constant 0 : i32
    return %arg0, %c0_i32 : i32, i32
  }
}

</mosaic_0001>

<llo_original>
// kernel: squeeze.1
$region0: #{squeeze.1}
  %s0 = inlined_call_operand.vmem [shape: f32[1,4,32], index: 0, kind: input, shape index: {}]
  %s1 = inlined_call_operand.vmem [shape: f32[1,128], index: 1, kind: output, shape index: {}]
  $region1: #{squeeze.1} parent=0
    #allocation0 [shape = 'u8[4096]{0}', space=vmem, size = 0x1000, scoped, tag = 'scoped mem for output reshape']
    #allocation1 [shape = 'u8[4096]{0}', space=vmem, size = 0x1000, scoped, tag = 'scoped mem for input reshape']
    %s3 = sshllo.u32 0, 4
    %v4 = vld [vmem:[%s0] sm:%s3]
    %5 = vst [vmem:[#allocation1] sm:%s3] %v4
    %v6 = vld [vmem:[#allocation1] sm:$0x1]
    %vm7 = vcmask 261120
    %8 = vst.msk [vmem:[#allocation0] sm:$0x1] %vm7, %v6
    %s9 = scalar_lea.vmem [#allocation1], 3
    %v10 = vld [vmem:[%s9] sm:$0x1]
    %11 = vrot.lane.b32.xlu0 %v10, 96
    %v12 = vpop.permute.xlu0 %11
    %vm13 = vcmask 1048320
    %14 = vst.msk [vmem:[#allocation0] sm:$0x1] %vm13, %v12
    %s15 = scalar_lea.vmem [#allocation1], 2
    %v16 = vld [vmem:[%s15] sm:$0x1]
    %17 = vrot.lane.b32.xlu0 %v16, 64
    %v18 = vpop.permute.xlu0 %17
    %vm19 = vcmask 785920
    %20 = vst.msk [vmem:[#allocation0] sm:$0x1] %vm19, %v18
    %s21 = scalar_lea.vmem [#allocation1], 1
    %v22 = vld [vmem:[%s21] sm:$0x1]
    %23 = vrot.lane.b32.xlu0 %v22, 32
    %v24 = vpop.permute.xlu0 %23
    %vm25 = vcmask 523520
    %26 = vst.msk [vmem:[#allocation0] sm:$0x1] %vm25, %v24
    %s28 = sshllo.u32 0, 1
    %v30 = vld [vmem:[#allocation0] sm:%s28]
    %s31 = sshllo.u32 0, 1
    %32 = vst [vmem:[%s1] sm:%s31] %v30

// kernel: positional_encoding_forward.1
$region0: #{positional_encoding_forward.1}
  #allocation0 [shape = 'u32[]', space=smem, size = 0x4, offset = 0x4, fixed_abs, tag = 'smem constant byte address 0x4 - core index']
  #allocation1 [shape = 'u32[144,128]{1,0:T(1,128)}', space=vmem, size = 0x12000, scoped, tag = 'internal scratch']
  %s0 = inlined_call_operand.vmem [shape: f32[8,128], index: 0, kind: input, shape index: {}]
  %s1 = inlined_call_operand.vmem [shape: f32[1,128], index: 1, kind: input, shape index: {}]
  %s2 = inlined_call_operand.vmem [shape: f32[8,128], index: 2, kind: output, shape index: {}]
  %s3 = sld [smem:[#allocation0]]
  $region18: #{positional_encoding_forward.1} parent=0
    _
  %s5 = ssub.s32 1, %s3
  %s6 = scalar_select 0, %s5, %s3
  // Predicated region
  $region2: #{positional_encoding_forward.1} parent=0 // pred_check
    _
  $region3: #{positional_encoding_forward.1} parent=0 // pred_check_branch
    %8 = sbr.rel (0) target = $region5
  $region4: #{positional_encoding_forward.1} parent=0 // pred_region
    _
  $region5: #{positional_encoding_forward.1} parent=0 // pred_fallthru
    _
  // Predicated region
  $region6: #{positional_encoding_forward.1} parent=0 // pred_check
    _
  $region7: #{positional_encoding_forward.1} parent=0 // pred_check_branch
    %10 = sbr.rel (0) target = $region9
  $region8: #{positional_encoding_forward.1} parent=0 // pred_region
    _
  $region9: #{positional_encoding_forward.1} parent=0 // pred_fallthru
    _
  %v11 = vld [vmem:[%s0] sm:$0xff]
  %v12 = vld [vmem:[%s1] sm:$0x1]
  %v14 = vlaneseq
  %v15 = vshrl.u32 %v14, 7
  %v16 = vsub.s32 0, %v15
  %v17 = vrot.slane %v12, %v16
  %v19 = vadd.f32 %v11, %v17
  %20 = vst [vmem:[%s2] sm:$0xff] %v19
  // Predicated region
  $region10: #{positional_encoding_forward.1} parent=0 // pred_check
    _
  $region11: #{positional_encoding_forward.1} parent=0 // pred_check_branch
    %22 = sbr.rel (0) target = $region13
  $region12: #{positional_encoding_forward.1} parent=0 // pred_region
    _
  $region13: #{positional_encoding_forward.1} parent=0 // pred_fallthru
    _
  // Predicated region
  $region14: #{positional_encoding_forward.1} parent=0 // pred_check
    _
  $region15: #{positional_encoding_forward.1} parent=0 // pred_check_branch
    %24 = sbr.rel (0) target = $region17
  $region16: #{positional_encoding_forward.1} parent=0 // pred_region
    _
  $region17: #{positional_encoding_forward.1} parent=0 // pred_fallthru
    _

</llo_original>
